<compile_context>
chip_gen: v7x
topology: tpu7x:2x2x1
jax: 0.10.0
libtpu: 0.0.40
codegen_flags: <defaults>
</compile_context>

<pallas_src>
import jax
import jax.numpy as jnp
from jax import lax
from jax.experimental import pallas as pl
from jax.experimental.pallas import tpu as pltpu

# NOTE: differs from PyTorch BatchNorm1d's default eps=1e-5; kept at 1e-8 to
# match the canonical Dice formulation (reference `dice_ref` uses the same).
_EPS = 1e-8

# Per-block VMEM budget (bytes) for x + out with double buffering.  Kept well
# under v7x's 64 MiB physical / 32 MiB default-scoped VMEM so one tile size is
# safe on v5e / v6e / v7x alike.
_VMEM_BLOCK_BUDGET = 8 * 1024 * 1024
# Lane-width ceiling for one block.  Big tiles amortize the ~0.35 us/step grid
# overhead for this mem-bound kernel; the VMEM budget is the real limiter.
_MAX_TILE_H = 8192


def _pick_tile_h(B: int, H: int) -> int:
    """Choose a lane-dense H tile that fits the VMEM budget (full B per block)."""
    if H <= 512:
        # Small feature dim: one block along H (block dim == full array dim is
        # always legal, even when H is not a multiple of 128).
        return H
    # x + out, double-buffered, f32 staging: 2 arrays x 2 buffers x B x 4 bytes
    # per lane column.
    bytes_per_lane_col = 4 * B * 4
    max_tile = _VMEM_BLOCK_BUDGET // max(bytes_per_lane_col, 1)
    tile = max(128, (max_tile // 128) * 128)     # multiple of 128 lanes
    tile = min(tile, _MAX_TILE_H)
    tile = min(tile, ((H + 127) // 128) * 128)   # no bigger than padded H
    return tile


def _dice_kernel(x_ref, alpha_ref, o_ref):
    # One block = full batch x TILE_H features.  The batch-axis reduction is
    # local to the block, so statistics are exact.
    x = x_ref[...].astype(jnp.float32)           # (B, TILE_H)
    alpha = alpha_ref[...].astype(jnp.float32)   # (1, TILE_H)

    b = x.shape[0]
    inv_b = 1.0 / b
    # Two-pass (centered) variance: numerically robust, same VALU op count as
    # the E[x^2] one-pass form (3 full-size elementwise ops + 2 XLU reduces).
    mean = jnp.sum(x, axis=0, keepdims=True) * inv_b           # (1, TILE_H)
    centered = x - mean
    var = jnp.sum(centered * centered, axis=0, keepdims=True) * inv_b
    x_norm = centered * lax.rsqrt(var + _EPS)                  # rsqrt -> EUP

    p = jax.nn.sigmoid(x_norm)                                 # sigmoid -> EUP
    # Refactored: p*x + alpha*(1-p)*x == x * (alpha + (1 - alpha) * p)
    # -> saves two full-size B x TILE_H VALU ops; (1 - alpha) is a (1, TILE_H) row.
    one_minus_alpha = 1.0 - alpha
    o_ref[...] = (x * (alpha + one_minus_alpha * p)).astype(o_ref.dtype)


def dice(x: jax.Array, alpha: jax.Array) -> jax.Array:
    """Dice activation. x: [B, H], alpha: [H]. Output dtype follows x."""
    B, H = x.shape
    alpha2d = alpha.reshape(1, H)
    tile_h = _pick_tile_h(B, H)
    grid = (pl.cdiv(H, tile_h),)

    return pl.pallas_call(
        _dice_kernel,
        out_shape=jax.ShapeDtypeStruct((B, H), x.dtype),
        grid=grid,
        in_specs=[
            pl.BlockSpec((B, tile_h), lambda j: (0, j)),
            pl.BlockSpec((1, tile_h), lambda j: (0, j)),
        ],
        out_specs=pl.BlockSpec((B, tile_h), lambda j: (0, j)),
        compiler_params=pltpu.CompilerParams(
            # H tiles are independent -> shard across both TCs on v7x;
            # harmless on single-TC v5e/v6e.
            dimension_semantics=("parallel",),
            vmem_limit_bytes=32 * 1024 * 1024,
        ),
    )(x, alpha2d)


def dice_ref(x: jax.Array, alpha: jax.Array) -> jax.Array:
    """Pure-JAX reference for correctness checking."""
    xf = x.astype(jnp.float32)
    mean = jnp.mean(xf, axis=0, keepdims=True)
    var = jnp.mean((xf - mean) ** 2, axis=0, keepdims=True)
    x_norm = (xf - mean) / jnp.sqrt(var + _EPS)
    p = jax.nn.sigmoid(x_norm)
    out = p * xf + alpha[None, :].astype(jnp.float32) * (1.0 - p) * xf
    return out.astype(x.dtype)


if __name__ == "__main__":
    key = jax.random.PRNGKey(0)

    # Primary toy-sized test consistent with the module (hidden=32, batch=8).
    B, H = 8, 32
    x = jax.random.normal(key, (B, H), dtype=jnp.float32)
    # Deterministic parameter init: alpha = zeros (standard Dice init).
    alpha = jnp.zeros((H,), dtype=jnp.float32)

    out = dice(x, alpha)
    jax.block_until_ready(out)
    ref = dice_ref(x, alpha)
    assert out.shape == (B, H) and out.dtype == jnp.float32
    assert jnp.allclose(out, ref, atol=1e-5, rtol=1e-5), "mismatch vs reference (toy)"

    # Secondary test exercising the gridded / pipelined path (H > 512 branch).
    k1, k2 = jax.random.split(key)
    B2, H2 = 16, 2048
    x2 = jax.random.normal(k1, (B2, H2), dtype=jnp.float32)
    alpha2 = 0.1 * jax.random.normal(k2, (H2,), dtype=jnp.float32)

    out2 = dice(x2, alpha2)
    jax.block_until_ready(out2)
    ref2 = dice_ref(x2, alpha2)
    assert out2.shape == (B2, H2)
    assert jnp.allclose(out2, ref2, atol=1e-5, rtol=1e-5), "mismatch vs reference (grid)"

    print("KERNEL_OK")
</pallas_src>

<mosaic_0001>
module attributes {stable_mosaic.version = 11 : i64} {
  func.func @_dice_kernel(%arg0: i32, %arg1: memref<8x32xf32, #tpu.memory_space<vmem>>, %arg2: memref<1x32xf32, #tpu.memory_space<vmem>>, %arg3: memref<8x32xf32, #tpu.memory_space<vmem>>) attributes {dimension_semantics = [#tpu.dimension_semantics<parallel>], iteration_bounds = array<i64: 1>, scalar_prefetch = 0 : i64, scratch_operands = 0 : i64, tpu.core_type = #tpu.core_type<tc>, window_params = [{transform_indices = @transform_0, window_bounds = array<i64: 8, 32>}, {transform_indices = @transform_1, window_bounds = array<i64: 1, 32>}, {transform_indices = @transform_2, window_bounds = array<i64: 8, 32>}]} {
    %c0 = arith.constant 0 : index
    %c0_0 = arith.constant 0 : index
    %0 = vector.load %arg1[%c0, %c0_0] : memref<8x32xf32, #tpu.memory_space<vmem>>, vector<8x32xf32>
    %c0_1 = arith.constant 0 : index
    %c0_2 = arith.constant 0 : index
    %1 = vector.load %arg2[%c0_1, %c0_2] : memref<1x32xf32, #tpu.memory_space<vmem>>, vector<1x32xf32>
    %cst = arith.constant dense<0.000000e+00> : vector<32xf32>
    %2 = vector.multi_reduction <add>, %0, %cst [0] : vector<8x32xf32> to vector<32xf32>
    %3 = vector.shape_cast %2 : vector<32xf32> to vector<1x32xf32>
    %cst_3 = arith.constant 1.250000e-01 : f32
    %4 = vector.broadcast %cst_3 : f32 to vector<1x32xf32>
    %5 = arith.mulf %3, %4 : vector<1x32xf32>
    %6 = vector.broadcast %5 : vector<1x32xf32> to vector<8x32xf32>
    %7 = arith.subf %0, %6 : vector<8x32xf32>
    %8 = arith.mulf %7, %7 : vector<8x32xf32>
    %cst_4 = arith.constant dense<0.000000e+00> : vector<32xf32>
    %9 = vector.multi_reduction <add>, %8, %cst_4 [0] : vector<8x32xf32> to vector<32xf32>
    %10 = vector.shape_cast %9 : vector<32xf32> to vector<1x32xf32>
    %cst_5 = arith.constant 1.250000e-01 : f32
    %11 = vector.broadcast %cst_5 : f32 to vector<1x32xf32>
    %12 = arith.mulf %10, %11 : vector<1x32xf32>
    %cst_6 = arith.constant 9.99999993E-9 : f32
    %13 = vector.broadcast %cst_6 : f32 to vector<1x32xf32>
    %14 = arith.addf %12, %13 : vector<1x32xf32>
    %15 = math.rsqrt %14 : vector<1x32xf32>
    %16 = vector.broadcast %15 : vector<1x32xf32> to vector<8x32xf32>
    %17 = arith.mulf %7, %16 : vector<8x32xf32>
    %18 = arith.negf %17 : vector<8x32xf32>
    %19 = math.exp %18 : vector<8x32xf32>
    %cst_7 = arith.constant 1.000000e+00 : f32
    %20 = vector.broadcast %cst_7 : f32 to vector<8x32xf32>
    %21 = arith.addf %20, %19 : vector<8x32xf32>
    %22 = arith.divf %20, %21 : vector<8x32xf32>
    %cst_8 = arith.constant 1.000000e+00 : f32
    %23 = vector.broadcast %cst_8 : f32 to vector<1x32xf32>
    %24 = arith.subf %23, %1 : vector<1x32xf32>
    %25 = vector.broadcast %24 : vector<1x32xf32> to vector<8x32xf32>
    %26 = arith.mulf %25, %22 : vector<8x32xf32>
    %27 = vector.broadcast %1 : vector<1x32xf32> to vector<8x32xf32>
    %28 = arith.addf %27, %26 : vector<8x32xf32>
    %29 = arith.mulf %0, %28 : vector<8x32xf32>
    %c0_9 = arith.constant 0 : index
    %c0_10 = arith.constant 0 : index
    %30 = vector.load %arg3[%c0_9, %c0_10] : memref<8x32xf32, #tpu.memory_space<vmem>>, vector<8x32xf32>
    tpu.vector_store %arg3[%c0_9, %c0_10], %29 {strides = array<i32>} : memref<8x32xf32, #tpu.memory_space<vmem>>, vector<8x32xf32>,
    return
  }
  func.func @transform_0(%arg0: i32) -> (i32, i32) {
    %c0_i32 = arith.constant 0 : i32
    %c0_i32_0 = arith.constant 0 : i32
    return %c0_i32, %arg0 : i32, i32
  }
  func.func @transform_1(%arg0: i32) -> (i32, i32) {
    %c0_i32 = arith.constant 0 : i32
    %c0_i32_0 = arith.constant 0 : i32
    return %c0_i32, %arg0 : i32, i32
  }
  func.func @transform_2(%arg0: i32) -> (i32, i32) {
    %c0_i32 = arith.constant 0 : i32
    %c0_i32_0 = arith.constant 0 : i32
    return %c0_i32, %arg0 : i32, i32
  }
}

</mosaic_0001>

<llo_original>
// kernel: tpu_custom_call.1
$region0: #{tpu_custom_call.1}
  #allocation0 [shape = 'u32[]', space=smem, size = 0x4, offset = 0x4, fixed_abs, tag = 'smem constant byte address 0x4 - core index']
  #allocation1 [shape = 'u32[144,128]{1,0:T(1,128)}', space=vmem, size = 0x12000, scoped, tag = 'internal scratch']
  %s0 = inlined_call_operand.hbm [shape: f32[8,32], index: 0, kind: input, shape index: {}]
  %s1 = inlined_call_operand.vmem [shape: f32[1,32], index: 1, kind: input, shape index: {}]
  %s2 = inlined_call_operand.hbm [shape: f32[8,32], index: 2, kind: output, shape index: {}]
  %s3 = sld [smem:[#allocation0]]
  $region22: #{tpu_custom_call.1} parent=0
    _
  %s5 = ssub.s32 1, %s3
  %s6 = scalar_select 0, %s5, %s3
  $region1: #{tpu_custom_call.1} parent=0
    #allocation2 [shape = 'u8[4096]{0}', space=vmem, size = 0x1000, scoped, tag = 'input window, operand 0, single buffered']
    #allocation3 [shape = 's32[1]{0}', space=sflag, size = 0x4, scoped, tag = 'scoped memory for tpu_custom_call.1']
    #allocation4 [shape = 's32[1]{0}', space=sflag, size = 0x4, scoped, tag = 'scoped memory for tpu_custom_call.1']
    #allocation5 [shape = 'u8[4096]{0}', space=vmem, size = 0x1000, scoped, tag = 'output window, operand 0, single buffered']
    %7 = vsyncpa [#allocation3], 0
    %8 = vsyncpa [#allocation4], 0
    // Predicated region
    $region2: #{tpu_custom_call.1} parent=1 // pred_check
      _
    $region3: #{tpu_custom_call.1} parent=1 // pred_check_branch
      %10 = sbr.rel (0) target = $region5
    $region4: #{tpu_custom_call.1} parent=1 // pred_region
      %s12 = ssub.s32 128, 128
      %13 = vsyncadd [#allocation3], %s12
      %s15 = sshll.u32 [#allocation2], 4
      %s16 = int_to_ptr.vmem [resolvable:$true] %s15
      %18 = dma.hbm_to_vmem [thread:$0]  %s0, 128, %s16, [#allocation3]
    $region5: #{tpu_custom_call.1} parent=1 // pred_fallthru
      _
    // Predicated region
    $region6: #{tpu_custom_call.1} parent=1 // pred_check
      _
    $region7: #{tpu_custom_call.1} parent=1 // pred_check_branch
      %20 = sbr.rel (0) target = $region9
    $region8: #{tpu_custom_call.1} parent=1 // pred_region
      _
    $region9: #{tpu_custom_call.1} parent=1 // pred_fallthru
      _
    // Predicated region
    $region10: #{tpu_custom_call.1} parent=1 // pred_check
      _
    $region11: #{tpu_custom_call.1} parent=1 // pred_check_branch
      %22 = sbr.rel (0) target = $region13
    $region12: #{tpu_custom_call.1} parent=1 // pred_region
      %23 = dma.done [#allocation3], 128
    $region13: #{tpu_custom_call.1} parent=1 // pred_fallthru
      _
    %v24 = vld [vmem:[#allocation2] sm:$0xff]
    %v25 = vld [vmem:[%s1] sm:$0x1]
    %vm26 = vcmask 261120
    %v27 = vsel %vm26, %v24, 0.0
    %v28 = vrot.slane %v27, 4
    %v29 = vadd.f32 %v27, %v28
    %v30 = vrot.slane %v29, 2
    %v31 = vadd.f32 %v29, %v30
    %v32 = vrot.slane %v31, 1
    %v33 = vadd.f32 %v31, %v32
    %v34 = vmul.f32 %v33, 0.125
    %v35 = vsub.f32 %v24, %v34
    %v36 = vmul.f32 %v35, %v35
    %v37 = vsel %vm26, %v36, 0.0
    %v38 = vrot.slane %v37, 4
    %v39 = vadd.f32 %v37, %v38
    %v40 = vrot.slane %v39, 2
    %v41 = vadd.f32 %v39, %v40
    %v42 = vrot.slane %v41, 1
    %v43 = vadd.f32 %v41, %v42
    %v44 = vmul.f32 %v43, 0.125
    %v45 = vadd.f32 %v44, 1e-08
    %v46 = vrsqrt.pop %v45
    %v47 = vmul.f32 %v35, %v46
    %v48 = vxor.u32 %v47, 2147483648
    %v49 = vmul.f32 %v48, 1.442695
    %v50 = vpow.pop %v49
    %v51 = vadd.f32 %v50, 1.0
    %v52 = vrcp.pop %v51
    %v53 = vmul.f32 1.0, %v52
    %v54 = vsub.f32 1.0, %v25
    %v56 = vlaneseq
    %v57 = vshrl.u32 %v56, 7
    %v58 = vsub.s32 0, %v57
    %v59 = vrot.slane %v54, %v58
    %v61 = vmul.f32 %v59, %v53
    %v63 = vlaneseq
    %v64 = vshrl.u32 %v63, 7
    %v65 = vsub.s32 0, %v64
    %v66 = vrot.slane %v25, %v65
    %v68 = vadd.f32 %v66, %v61
    %v69 = vmul.f32 %v24, %v68
    %70 = vst.msk [vmem:[#allocation5] sm:$0xff] %vm26, %v69
    // Predicated region
    $region14: #{tpu_custom_call.1} parent=1 // pred_check
      _
    $region15: #{tpu_custom_call.1} parent=1 // pred_check_branch
      %72 = sbr.rel (0) target = $region17
    $region16: #{tpu_custom_call.1} parent=1 // pred_region
      %s74 = ssub.s32 128, 128
      %75 = vsyncadd [#allocation4], %s74
      %s77 = sshll.u32 [#allocation5], 4
      %s78 = int_to_ptr.vmem [resolvable:$true] %s77
      %80 = dma.vmem_to_hbm [thread:$0]  %s78, 128, %s2, [#allocation4]
    $region17: #{tpu_custom_call.1} parent=1 // pred_fallthru
      _
    // Predicated region
    $region18: #{tpu_custom_call.1} parent=1 // pred_check
      _
    $region19: #{tpu_custom_call.1} parent=1 // pred_check_branch
      %82 = sbr.rel (0) target = $region21
    $region20: #{tpu_custom_call.1} parent=1 // pred_region
      %83 = dma.done [#allocation4], 128
    $region21: #{tpu_custom_call.1} parent=1 // pred_fallthru
      _
    %84 = vsyncpa [#allocation3], 1
    %85 = vsyncpa [#allocation4], 1

</llo_original>
